<compile_context>
chip_gen: v7x
topology: tpu7x:2x2x1
jax: 0.10.0
libtpu: 0.0.40
codegen_flags: <defaults>
</compile_context>

<pallas_src>
import math
import jax
import jax.numpy as jnp
from jax import lax
from jax.experimental import pallas as pl
from jax.experimental.pallas import tpu as pltpu


def _round_up(x, m):
    return (x + m - 1) // m * m


# ----------------------------------------------------------------------------
# Pallas kernel: one NGCF propagation layer.
#   grid = (row tiles, K tiles)
#   K axis: accumulate A_hat[rows, ktile] @ ego[ktile, :] into side_acc (f32).
#   Last K step: fused projection + LeakyReLU(0.2) + L2 row normalize.
# ----------------------------------------------------------------------------
def ngcf_layer_kernel(a_ref, ego_k_ref, ego_row_ref, w_ref, b_ref,
                      ego_out_ref, norm_out_ref, side_acc):
    k = pl.program_id(1)

    @pl.when(k == 0)
    def _():
        side_acc[...] = jnp.zeros_like(side_acc)

    # Partial contraction on the MXU: bf16 x bf16 -> f32 accumulate.
    side_acc[...] += jnp.dot(a_ref[...], ego_k_ref[...],
                             preferred_element_type=jnp.float32)

    @pl.when(k == pl.num_programs(1) - 1)
    def _():
        side = side_acc[...]                               # [tm, Dp] f32
        ego_tile = ego_row_ref[...]                        # [tm, Dp] f32
        # Fused projection: [side | ego*side] @ [W_gc ; W_bi] + (b_gc + b_bi)
        lhs = jnp.concatenate([side, ego_tile * side], axis=1)   # [tm, 2*Dp]
        z = jnp.dot(lhs, w_ref[...], preferred_element_type=jnp.float32)
        z = z + b_ref[...]
        # LeakyReLU(negative_slope=0.2); mess dropout = identity (eval mode).
        ego_new = jnp.where(z >= 0, z, 0.2 * z)
        # F.normalize(p=2, dim=1): x * rsqrt(max(sum(x^2), eps^2))  (EUP rsqrt)
        sumsq = jnp.sum(ego_new * ego_new, axis=1, keepdims=True)
        inv_norm = lax.rsqrt(jnp.maximum(sumsq, 1e-24))
        ego_out_ref[...] = ego_new
        norm_out_ref[...] = ego_new * inv_norm


def ngcf_layer(a_bf16, ego_f32, w_stack, b_sum, *, tm=128, tk=128):
    Np, Dp = ego_f32.shape
    assert Np % tm == 0 and Np % tk == 0 and Dp % 128 == 0
    ego_bf16 = ego_f32.astype(jnp.bfloat16)   # bf16 stream for the contraction
    full = lambda i, k: (0, 0)
    return pl.pallas_call(
        ngcf_layer_kernel,
        out_shape=(jax.ShapeDtypeStruct((Np, Dp), jnp.float32),
                   jax.ShapeDtypeStruct((Np, Dp), jnp.float32)),
        grid_spec=pltpu.PrefetchScalarGridSpec(
            num_scalar_prefetch=0,
            grid=(Np // tm, Np // tk),
            in_specs=[
                pl.BlockSpec((tm, tk), lambda i, k: (i, k)),   # A_hat tile (bf16)
                pl.BlockSpec((tk, Dp), lambda i, k: (k, 0)),   # ego K tile (bf16)
                pl.BlockSpec((tm, Dp), lambda i, k: (i, 0)),   # ego row tile (f32)
                pl.BlockSpec((2 * Dp, Dp), full),              # [W_gc ; W_bi]
                pl.BlockSpec((1, Dp), full),                   # b_gc + b_bi
            ],
            out_specs=[
                pl.BlockSpec((tm, Dp), lambda i, k: (i, 0)),   # new ego
                pl.BlockSpec((tm, Dp), lambda i, k: (i, 0)),   # normalized ego
            ],
            scratch_shapes=[pltpu.VMEM((tm, Dp), jnp.float32)],
        ),
        compiler_params=pltpu.CompilerParams(
            dimension_semantics=("parallel", "arbitrary"),
            vmem_limit_bytes=48 * 1024 * 1024),
    )(a_bf16, ego_bf16, ego_f32, w_stack, b_sum)


# ----------------------------------------------------------------------------
# Full PointNGCF forward (eval mode)
# ----------------------------------------------------------------------------
def point_ngcf_forward(params, a_hat, user, item_i, n_user, *, tm=128, tk=128):
    D = params["user_emb"].shape[1]
    ego = jnp.concatenate([params["user_emb"], params["item_emb"]], axis=0)
    N = ego.shape[0]
    Dp = _round_up(D, 128)                       # lane-dense factor dim
    Np = _round_up(N, math.lcm(tm, tk))          # tile-multiple node dim

    # Zero padding is exact: padded A rows/cols are zero so padded node rows
    # never influence real rows; padded factor columns stay exactly zero.
    ego_p = jnp.zeros((Np, Dp), jnp.float32).at[:N, :D].set(ego)
    a_p = jnp.zeros((Np, Np), jnp.float32).at[:N, :N].set(a_hat)
    a_bf16 = a_p.astype(jnp.bfloat16)            # cast once, reused by 3 layers

    all_emb = [ego]
    for k in range(3):
        w_stack = jnp.zeros((2 * Dp, Dp), jnp.float32)
        w_stack = w_stack.at[:D, :D].set(params[f"W_gc_{k}"])
        w_stack = w_stack.at[Dp:Dp + D, :D].set(params[f"W_bi_{k}"])
        b_sum = jnp.zeros((1, Dp), jnp.float32).at[:, :D].set(
            params[f"b_gc_{k}"] + params[f"b_bi_{k}"])
        ego_p, norm_p = ngcf_layer(a_bf16, ego_p, w_stack, b_sum, tm=tm, tk=tk)
        all_emb.append(norm_p[:N, :D])

    all_embeddings = jnp.concatenate(all_emb, axis=1)        # [N, 4*D]
    u_g = all_embeddings[:n_user, :]
    i_g = all_embeddings[n_user:, :]
    u_g_embeddings = u_g[user, :]
    pos_i_g_embeddings = i_g[item_i, :]
    # Gather + row-wise dot left to XLA: at B=8 a Pallas call is pure overhead.
    pos_scores = jnp.sum(u_g_embeddings * pos_i_g_embeddings, axis=1)
    return u_g_embeddings, pos_i_g_embeddings, pos_scores


# ----------------------------------------------------------------------------
# Deterministic parameter / input construction
# ----------------------------------------------------------------------------
def xavier_uniform(key, shape):
    fan_in, fan_out = shape[0], shape[1]
    limit = (6.0 / (fan_in + fan_out)) ** 0.5
    return jax.random.uniform(key, shape, jnp.float32, -limit, limit)


def build_params(key, n_user, n_item, factors):
    keys = jax.random.split(key, 2 + 4 * 3)
    params = {
        "user_emb": xavier_uniform(keys[0], (n_user, factors)),
        "item_emb": xavier_uniform(keys[1], (n_item, factors)),
    }
    ki = 2
    for k in range(3):
        params[f"W_gc_{k}"] = xavier_uniform(keys[ki], (factors, factors)); ki += 1
        params[f"b_gc_{k}"] = xavier_uniform(keys[ki], (1, factors)); ki += 1
        params[f"W_bi_{k}"] = xavier_uniform(keys[ki], (factors, factors)); ki += 1
        params[f"b_bi_{k}"] = xavier_uniform(keys[ki], (1, factors)); ki += 1
    return params


def build_norm_adj(key, n_user, n_item):
    # Synthetic symmetric-normalized bipartite adjacency (dense).
    N = n_user + n_item
    r = jax.random.uniform(key, (n_user, n_item), jnp.float32)
    R = jnp.where(r < 0.1, 1.0, 0.0)
    A = jnp.zeros((N, N), jnp.float32)
    A = A.at[:n_user, n_user:].set(R)
    A = A.at[n_user:, :n_user].set(R.T)
    deg = jnp.sum(A, axis=1)
    d_inv_sqrt = jnp.where(deg > 0, 1.0 / jnp.sqrt(deg), 0.0)
    return A * d_inv_sqrt[:, None] * d_inv_sqrt[None, :]


# ----------------------------------------------------------------------------
# References for correctness checking
# ----------------------------------------------------------------------------
def reference_forward_f32(params, a_hat, user, item_i, n_user):
    """Torch-faithful all-f32 reference."""
    ego = jnp.concatenate([params["user_emb"], params["item_emb"]], axis=0)
    all_emb = [ego]
    for k in range(3):
        side = a_hat @ ego
        s = side @ params[f"W_gc_{k}"] + params[f"b_gc_{k}"]
        b = (ego * side) @ params[f"W_bi_{k}"] + params[f"b_bi_{k}"]
        z = s + b
        ego = jnp.where(z >= 0, z, 0.2 * z)
        nrm = jnp.maximum(jnp.linalg.norm(ego, axis=1, keepdims=True), 1e-12)
        all_emb.append(ego / nrm)
    all_emb = jnp.concatenate(all_emb, axis=1)
    u = all_emb[:n_user][user]
    i = all_emb[n_user:][item_i]
    return u, i, jnp.sum(u * i, axis=1)


def reference_forward_matched(params, a_hat, user, item_i, n_user):
    """Reference mirroring the kernel's bf16 contraction + rsqrt normalize."""
    ego = jnp.concatenate([params["user_emb"], params["item_emb"]], axis=0)
    a_bf16 = a_hat.astype(jnp.bfloat16)
    all_emb = [ego]
    for k in range(3):
        side = jnp.dot(a_bf16, ego.astype(jnp.bfloat16),
                       preferred_element_type=jnp.float32)
        s = side @ params[f"W_gc_{k}"] + params[f"b_gc_{k}"]
        b = (ego * side) @ params[f"W_bi_{k}"] + params[f"b_bi_{k}"]
        z = s + b
        ego = jnp.where(z >= 0, z, 0.2 * z)
        sumsq = jnp.sum(ego * ego, axis=1, keepdims=True)
        all_emb.append(ego * lax.rsqrt(jnp.maximum(sumsq, 1e-24)))
    all_emb = jnp.concatenate(all_emb, axis=1)
    u = all_emb[:n_user][user]
    i = all_emb[n_user:][item_i]
    return u, i, jnp.sum(u * i, axis=1)


if __name__ == "__main__":
    # Small shapes; N = 250 (not a tile multiple) exercises the padding path.
    n_user, n_item, factors, batch = 100, 150, 32, 8

    key = jax.random.PRNGKey(0)
    k_param, k_adj, k_u, k_i = jax.random.split(key, 4)
    params = build_params(k_param, n_user, n_item, factors)
    a_hat = build_norm_adj(k_adj, n_user, n_item)
    user = jax.random.randint(k_u, (batch,), 0, n_user)
    item_i = jax.random.randint(k_i, (batch,), 0, n_item)

    u_emb, i_emb, scores = point_ngcf_forward(params, a_hat, user, item_i, n_user)
    jax.block_until_ready((u_emb, i_emb, scores))

    u_m, i_m, s_m = reference_forward_matched(params, a_hat, user, item_i, n_user)
    u_f, i_f, s_f = reference_forward_f32(params, a_hat, user, item_i, n_user)

    assert u_emb.shape == (batch, 4 * factors)
    assert i_emb.shape == (batch, 4 * factors)
    assert scores.shape == (batch,)
    # Tight check vs the bf16-matched reference.
    assert jnp.allclose(u_emb, u_m, atol=2e-3, rtol=2e-3)
    assert jnp.allclose(i_emb, i_m, atol=2e-3, rtol=2e-3)
    assert jnp.allclose(scores, s_m, atol=2e-3, rtol=2e-3)
    # Loose check vs the torch-faithful f32 reference (bf16 A/ego rounding).
    assert jnp.allclose(u_emb, u_f, atol=8e-2, rtol=8e-2)
    assert jnp.allclose(i_emb, i_f, atol=8e-2, rtol=8e-2)
    assert jnp.allclose(scores, s_f, atol=8e-2, rtol=8e-2)

    print("KERNEL_OK")
</pallas_src>

<mosaic_0001>
module attributes {stable_mosaic.version = 11 : i64} {
  func.func @ngcf_layer_kernel(%arg0: i32, %arg1: i32, %arg2: memref<128x128xbf16, #tpu.memory_space<vmem>>, %arg3: memref<128x128xbf16, #tpu.memory_space<vmem>>, %arg4: memref<128x128xf32, #tpu.memory_space<vmem>>, %arg5: memref<256x128xf32, #tpu.memory_space<vmem>>, %arg6: memref<1x128xf32, #tpu.memory_space<vmem>>, %arg7: memref<128x128xf32, #tpu.memory_space<vmem>>, %arg8: memref<128x128xf32, #tpu.memory_space<vmem>>, %arg9: memref<128x128xf32, #tpu.memory_space<vmem>>) attributes {dimension_semantics = [#tpu.dimension_semantics<parallel>, #tpu.dimension_semantics<arbitrary>], iteration_bounds = array<i64: 2, 2>, scalar_prefetch = 0 : i64, scratch_operands = 1 : i64, tpu.core_type = #tpu.core_type<tc>, window_params = [{transform_indices = @transform_0, window_bounds = array<i64: 128, 128>}, {transform_indices = @transform_1, window_bounds = array<i64: 128, 128>}, {transform_indices = @transform_2, window_bounds = array<i64: 128, 128>}, {pipeline_mode = #tpu.pipeline_mode<synchronous>, transform_indices = @transform_3, window_bounds = array<i64: 256, 128>}, {pipeline_mode = #tpu.pipeline_mode<synchronous>, transform_indices = @transform_4, window_bounds = array<i64: 1, 128>}, {transform_indices = @transform_5, window_bounds = array<i64: 128, 128>}, {transform_indices = @transform_6, window_bounds = array<i64: 128, 128>}]} {
    %c0_i32 = arith.constant 0 : i32
    %0 = arith.cmpi eq, %arg1, %c0_i32 : i32
    %1 = arith.extui %0 : i1 to i32
    %c0_i32_0 = arith.constant 0 : i32
    %2 = arith.cmpi ne, %1, %c0_i32_0 : i32
    scf.if %2 {
      %cst_9 = arith.constant 0.000000e+00 : f32
      %12 = vector.broadcast %cst_9 : f32 to vector<128x128xf32>
      %c0_10 = arith.constant 0 : index
      %c0_11 = arith.constant 0 : index
      %13 = vector.load %arg9[%c0_10, %c0_11] : memref<128x128xf32, #tpu.memory_space<vmem>>, vector<128x128xf32>
      tpu.vector_store %arg9[%c0_10, %c0_11], %12 {strides = array<i32>} : memref<128x128xf32, #tpu.memory_space<vmem>>, vector<128x128xf32>,
    } else {
    }
    %c0 = arith.constant 0 : index
    %c0_1 = arith.constant 0 : index
    %3 = vector.load %arg9[%c0, %c0_1] : memref<128x128xf32, #tpu.memory_space<vmem>>, vector<128x128xf32>
    %c0_2 = arith.constant 0 : index
    %c0_3 = arith.constant 0 : index
    %4 = vector.load %arg2[%c0_2, %c0_3] : memref<128x128xbf16, #tpu.memory_space<vmem>>, vector<128x128xbf16>
    %c0_4 = arith.constant 0 : index
    %c0_5 = arith.constant 0 : index
    %5 = vector.load %arg3[%c0_4, %c0_5] : memref<128x128xbf16, #tpu.memory_space<vmem>>, vector<128x128xbf16>
    %cst = arith.constant dense<0.000000e+00> : vector<128x128xf32>
    %6 = tpu.matmul %4, %5, %cst {dimension_numbers = #tpu.dot_dimension_numbers<[1], [0], [0], [1], [0, 0, 1, 1], [], []>} : vector<128x128xbf16>, vector<128x128xbf16>, vector<128x128xf32> -> vector<128x128xf32>
    %7 = arith.addf %3, %6 : vector<128x128xf32>
    %c0_6 = arith.constant 0 : index
    %c0_7 = arith.constant 0 : index
    %8 = vector.load %arg9[%c0_6, %c0_7] : memref<128x128xf32, #tpu.memory_space<vmem>>, vector<128x128xf32>
    tpu.vector_store %arg9[%c0_6, %c0_7], %7 {strides = array<i32>} : memref<128x128xf32, #tpu.memory_space<vmem>>, vector<128x128xf32>,
    %c1_i32 = arith.constant 1 : i32
    %9 = arith.cmpi eq, %arg1, %c1_i32 : i32
    %10 = arith.extui %9 : i1 to i32
    %c0_i32_8 = arith.constant 0 : i32
    %11 = arith.cmpi ne, %10, %c0_i32_8 : i32
    scf.if %11 {
      %c0_9 = arith.constant 0 : index
      %c0_10 = arith.constant 0 : index
      %12 = vector.load %arg9[%c0_9, %c0_10] : memref<128x128xf32, #tpu.memory_space<vmem>>, vector<128x128xf32>
      %c0_11 = arith.constant 0 : index
      %c0_12 = arith.constant 0 : index
      %13 = vector.load %arg4[%c0_11, %c0_12] : memref<128x128xf32, #tpu.memory_space<vmem>>, vector<128x128xf32>
      %14 = arith.mulf %13, %12 : vector<128x128xf32>
      %15 = tpu.concatenate %12, %14 in 1 : vector<128x128xf32>, vector<128x128xf32> -> vector<128x256xf32>
      %c0_13 = arith.constant 0 : index
      %c0_14 = arith.constant 0 : index
      %16 = vector.load %arg5[%c0_13, %c0_14] : memref<256x128xf32, #tpu.memory_space<vmem>>, vector<256x128xf32>
      %cst_15 = arith.constant dense<0.000000e+00> : vector<128x128xf32>
      %17 = tpu.matmul %15, %16, %cst_15 {dimension_numbers = #tpu.dot_dimension_numbers<[1], [0], [0], [1], [0, 0, 1, 1], [], []>} : vector<128x256xf32>, vector<256x128xf32>, vector<128x128xf32> -> vector<128x128xf32>
      %c0_16 = arith.constant 0 : index
      %c0_17 = arith.constant 0 : index
      %18 = vector.load %arg6[%c0_16, %c0_17] : memref<1x128xf32, #tpu.memory_space<vmem>>, vector<1x128xf32>
      %19 = vector.broadcast %18 : vector<1x128xf32> to vector<128x128xf32>
      %20 = arith.addf %17, %19 : vector<128x128xf32>
      %cst_18 = arith.constant 0.000000e+00 : f32
      %21 = vector.broadcast %cst_18 : f32 to vector<128x128xf32>
      %22 = arith.cmpf oge, %20, %21 : vector<128x128xf32>
      %cst_19 = arith.constant 2.000000e-01 : f32
      %23 = vector.broadcast %cst_19 : f32 to vector<128x128xf32>
      %24 = arith.mulf %23, %20 : vector<128x128xf32>
      %25 = arith.select %22, %20, %24 : vector<128x128xi1>, vector<128x128xf32>
      %26 = arith.mulf %25, %25 : vector<128x128xf32>
      %cst_20 = arith.constant dense<0.000000e+00> : vector<128xf32>
      %27 = vector.multi_reduction <add>, %26, %cst_20 [1] : vector<128x128xf32> to vector<128xf32>
      %28 = vector.shape_cast %27 : vector<128xf32> to vector<128x1xf32>
      %cst_21 = arith.constant 1.000000e-24 : f32
      %29 = vector.broadcast %cst_21 : f32 to vector<128x1xf32>
      %30 = arith.maximumf %28, %29 : vector<128x1xf32>
      %31 = math.rsqrt %30 : vector<128x1xf32>
      %c0_22 = arith.constant 0 : index
      %c0_23 = arith.constant 0 : index
      %32 = vector.load %arg7[%c0_22, %c0_23] : memref<128x128xf32, #tpu.memory_space<vmem>>, vector<128x128xf32>
      tpu.vector_store %arg7[%c0_22, %c0_23], %25 {strides = array<i32>} : memref<128x128xf32, #tpu.memory_space<vmem>>, vector<128x128xf32>,
      %33 = vector.broadcast %31 : vector<128x1xf32> to vector<128x128xf32>
      %34 = arith.mulf %25, %33 : vector<128x128xf32>
      %c0_24 = arith.constant 0 : index
      %c0_25 = arith.constant 0 : index
      %35 = vector.load %arg8[%c0_24, %c0_25] : memref<128x128xf32, #tpu.memory_space<vmem>>, vector<128x128xf32>
      tpu.vector_store %arg8[%c0_24, %c0_25], %34 {strides = array<i32>} : memref<128x128xf32, #tpu.memory_space<vmem>>, vector<128x128xf32>,
    } else {
    }
    return
  }
  func.func @transform_0(%arg0: i32, %arg1: i32) -> (i32, i32) {
    %c0_i32 = arith.constant 0 : i32
    return %arg0, %arg1 : i32, i32
  }
  func.func @transform_1(%arg0: i32, %arg1: i32) -> (i32, i32) {
    %c0_i32 = arith.constant 0 : i32
    %c0_i32_0 = arith.constant 0 : i32
    return %arg1, %c0_i32 : i32, i32
  }
  func.func @transform_2(%arg0: i32, %arg1: i32) -> (i32, i32) {
    %c0_i32 = arith.constant 0 : i32
    %c0_i32_0 = arith.constant 0 : i32
    return %arg0, %c0_i32 : i32, i32
  }
  func.func @transform_3(%arg0: i32, %arg1: i32) -> (i32, i32) {
    %c0_i32 = arith.constant 0 : i32
    %c0_i32_0 = arith.constant 0 : i32
    %c0_i32_1 = arith.constant 0 : i32
    return %c0_i32, %c0_i32_0 : i32, i32
  }
  func.func @transform_4(%arg0: i32, %arg1: i32) -> (i32, i32) {
    %c0_i32 = arith.constant 0 : i32
    %c0_i32_0 = arith.constant 0 : i32
    %c0_i32_1 = arith.constant 0 : i32
    return %c0_i32, %c0_i32_0 : i32, i32
  }
  func.func @transform_5(%arg0: i32, %arg1: i32) -> (i32, i32) {
    %c0_i32 = arith.constant 0 : i32
    %c0_i32_0 = arith.constant 0 : i32
    return %arg0, %c0_i32 : i32, i32
  }
  func.func @transform_6(%arg0: i32, %arg1: i32) -> (i32, i32) {
    %c0_i32 = arith.constant 0 : i32
    %c0_i32_0 = arith.constant 0 : i32
    return %arg0, %c0_i32 : i32, i32
  }
}

</mosaic_0001>

<llo_original>
// kernel: tpu_custom_call.1
$region0: #{tpu_custom_call.1}
  #allocation0 [shape = 'u32[]', space=smem, size = 0x4, offset = 0x4, fixed_abs, tag = 'smem constant byte address 0x4 - core index']
  #allocation1 [shape = 'u32[144,128]{1,0:T(1,128)}', space=vmem, size = 0x12000, scoped, tag = 'internal scratch']
  #allocation2 [shape = 'f32[128,128]{1,0:T(8,128)}', space=vmem, size = 0x10000, scoped, tag = 'scratch operand']
  %s0 = inlined_call_operand.hbm [shape: bf16[256,256], index: 0, kind: input, shape index: {}]
  %s1 = inlined_call_operand.hbm [shape: bf16[256,128], index: 1, kind: input, shape index: {}]
  %s2 = inlined_call_operand.hbm [shape: f32[256,128], index: 2, kind: input, shape index: {}]
  %s3 = inlined_call_operand.hbm [shape: f32[256,128], index: 3, kind: input, shape index: {}]
  %s4 = inlined_call_operand.vmem [shape: f32[1,128], index: 4, kind: input, shape index: {}]
  %s5 = inlined_call_operand.hbm [shape: f32[256,128], index: 5, kind: output, shape index: {0}]
  %s6 = inlined_call_operand.hbm [shape: f32[256,128], index: 6, kind: output, shape index: {1}]
  %7 = xla_tuple %s5, %s6
  %s8 = sld [smem:[#allocation0]]
  $region85: #{tpu_custom_call.1} parent=0
    _
  %s10 = ssub.s32 1, %s8
  %s11 = scalar_select 0, %s10, %s8
  $region1: #{tpu_custom_call.1} parent=0
    #allocation3 [shape = 'u8[65536]{0}', space=vmem, size = 0x10000, scoped, tag = 'input window, operand 0']
    #allocation4 [shape = 's32[2]{0}', space=sflag, size = 0x8, scoped, tag = 'scoped memory for tpu_custom_call.1']
    #allocation5 [shape = 's32[2]{0}', space=sflag, size = 0x8, scoped, tag = 'scoped memory for tpu_custom_call.1']
    #allocation6 [shape = 'u8[65536]{0}', space=vmem, size = 0x10000, scoped, tag = 'input window, operand 1']
    #allocation7 [shape = 's32[2]{0}', space=sflag, size = 0x8, scoped, tag = 'scoped memory for tpu_custom_call.1']
    #allocation8 [shape = 'u8[131072]{0}', space=vmem, size = 0x20000, scoped, tag = 'input window, operand 2']
    #allocation9 [shape = 'u8[131072]{0}', space=vmem, size = 0x20000, scoped, tag = 'input window, operand 3, single buffered']
    #allocation10 [shape = 's32[1]{0}', space=sflag, size = 0x4, scoped, tag = 'scoped memory for tpu_custom_call.1']
    #allocation11 [shape = 'u8[131072]{0}', space=vmem, size = 0x20000, scoped, tag = 'output window, operand 0']
    #allocation12 [shape = 'u8[131072]{0}', space=vmem, size = 0x20000, scoped, tag = 'output window, operand 1']
    #allocation13 [shape = 's32[2]{0}', space=sflag, size = 0x8, scoped, tag = 'scoped memory for tpu_custom_call.1']
    %12 = vsyncpa [#allocation4], 0
    %s13 = scalar_lea.sflag [#allocation4], 1
    %14 = vsyncpa %s13, 0
    %15 = vsyncpa [#allocation7], 0
    %s16 = scalar_lea.sflag [#allocation7], 1
    %17 = vsyncpa %s16, 0
    %18 = vsyncpa [#allocation10], 0
    %19 = vsyncpa [#allocation5], 0
    %s20 = scalar_lea.sflag [#allocation5], 1
    %21 = vsyncpa %s20, 0
    %22 = vsyncpa [#allocation13], 0
    %s23 = scalar_lea.sflag [#allocation13], 1
    %24 = vsyncpa %s23, 0
    loop: start=0, step=1, limit=6
    $region2: #{tpu_custom_call.1} parent=1 // loop_pre_header
      _
    $region3: #{tpu_custom_call.1} parent=1 // loop_header
      %s26 = sphi 0, %s30
      %p27 = scmp.ge.s32.totalorder %s26, 6
      %s33 = sphi 0, %s45
      %s34 = sphi 0, %s41
      %s35 = sphi 0, %s33
      %s36 = sphi 0, %s34
      %s37 = sphi 0, %s35
      %s38 = sphi 0, %s36
      %s50 = sphi 0, %s52
      %s53 = sphi 0, %s50
      %s54 = sphi 0, %s53
      %s70 = sphi 0, %s54
      %s76 = sphi 0, %s78
      %s79 = sphi 0, %s76
      %s80 = sphi 0, %s79
      %s96 = sphi 0, %s80
      %s102 = sphi 0, %s104
      %s105 = sphi 0, %s102
      %s106 = sphi 0, %s105
      %s122 = sphi 0, %s106
      %s126 = sphi 0, %s126
      %s128 = sphi 0, %s126
      %s129 = sphi 0, %s128
      %s143 = sphi 0, %s129
      %s147 = sphi 0, %s147
      %s149 = sphi 0, %s147
      %s150 = sphi 0, %s149
      %s164 = sphi 0, %s150
      %s170 = sphi 0, %s172
      %s173 = sphi 0, %s170
      %s174 = sphi 0, %s173
      %s190 = sphi 0, %s174
      %s196 = sphi 0, %s198
      %s199 = sphi 0, %s196
      %s200 = sphi 0, %s199
      %s216 = sphi 0, %s200
    $region4: #{tpu_custom_call.1} parent=1 // loop_header_branch
      %29 = sbr.rel (%p27) target = $region8
    $region5: #{tpu_custom_call.1} parent=1 // loop_body
      %s31 = ssub.s32 %s26, 1
      %s32 = ssub.s32 %s26, 2
      %s39 = sadd.s32 1, %s34
      %p40 = scmp.ge.s32.totalorder %s39, 2
      %s41 = scalar_select %p40, 0, %s39
      %s42 = sadd.s32 1, %s33
      %s43 = scalar_select %p40, %s42, %s33
      %p44 = scmp.ge.s32.totalorder %s43, 2
      %s45 = scalar_select %p44, 0, %s43
      %s46 = ssub.s32 %s33, %s45
      %s47 = ssub.s32 %s34, %s41
      %s48 = sor.u32 %s46, %s47
      %p49 = scmp.eq.s32.totalorder %s48, 0
      %s51 = sadd.s32 %s50, 1
      %s52 = scalar_select %p49, %s50, %s51
      %p55 = pneg %p49
      %p56 = scmp.eq.s32.totalorder %s26, 3
      %p57 = por %p55, %p56
      %p58 = scmp.ne.s32.totalorder %s50, %s53
      %p59 = scmp.eq.s32.totalorder %s26, 0
      %p60 = por %p58, %p59
      %p61 = scmp.ne.s32.totalorder %s50, %s53
      %p62 = scmp.eq.s32.totalorder %s31, 3
      %p63 = por %p61, %p62
      %p64 = scmp.ne.s32.totalorder %s53, %s54
      %p65 = scmp.eq.s32.totalorder %s31, 0
      %p66 = por %p64, %p65
      %p67 = scmp.ne.s32.totalorder %s53, %s54
      %p68 = scmp.eq.s32.totalorder %s32, 3
      %p69 = por %p67, %p68
      %p71 = scmp.ne.s32.totalorder %s54, %s70
      %p72 = scmp.eq.s32.totalorder %s32, 0
      %p73 = por %p71, %p72
      %s74 = ssub.s32 %s34, %s41
      %p75 = scmp.eq.s32.totalorder %s74, 0
      %s77 = sadd.s32 %s76, 1
      %s78 = scalar_select %p75, %s76, %s77
      %p81 = pneg %p75
      %p82 = scmp.eq.s32.totalorder %s26, 3
      %p83 = por %p81, %p82
      %p84 = scmp.ne.s32.totalorder %s76, %s79
      %p85 = scmp.eq.s32.totalorder %s26, 0
      %p86 = por %p84, %p85
      %p87 = scmp.ne.s32.totalorder %s76, %s79
      %p88 = scmp.eq.s32.totalorder %s31, 3
      %p89 = por %p87, %p88
      %p90 = scmp.ne.s32.totalorder %s79, %s80
      %p91 = scmp.eq.s32.totalorder %s31, 0
      %p92 = por %p90, %p91
      %p93 = scmp.ne.s32.totalorder %s79, %s80
      %p94 = scmp.eq.s32.totalorder %s32, 3
      %p95 = por %p93, %p94
      %p97 = scmp.ne.s32.totalorder %s80, %s96
      %p98 = scmp.eq.s32.totalorder %s32, 0
      %p99 = por %p97, %p98
      %s100 = ssub.s32 %s33, %s45
      %p101 = scmp.eq.s32.totalorder %s100, 0
      %s103 = sadd.s32 %s102, 1
      %s104 = scalar_select %p101, %s102, %s103
      %p107 = pneg %p101
      %p108 = scmp.eq.s32.totalorder %s26, 3
      %p109 = por %p107, %p108
      %p110 = scmp.ne.s32.totalorder %s102, %s105
      %p111 = scmp.eq.s32.totalorder %s26, 0
      %p112 = por %p110, %p111
      %p113 = scmp.ne.s32.totalorder %s102, %s105
      %p114 = scmp.eq.s32.totalorder %s31, 3
      %p115 = por %p113, %p114
      %p116 = scmp.ne.s32.totalorder %s105, %s106
      %p117 = scmp.eq.s32.totalorder %s31, 0
      %p118 = por %p116, %p117
      %p119 = scmp.ne.s32.totalorder %s105, %s106
      %p120 = scmp.eq.s32.totalorder %s32, 3
      %p121 = por %p119, %p120
      %p123 = scmp.ne.s32.totalorder %s106, %s122
      %p124 = scmp.eq.s32.totalorder %s32, 0
      %p125 = por %p123, %p124
      %s127 = sadd.s32 %s126, 1
      %p130 = scmp.eq.s32.totalorder %s26, 3
      %p131 = scmp.ne.s32.totalorder %s126, %s128
      %p132 = scmp.eq.s32.totalorder %s26, 0
      %p133 = por %p131, %p132
      %p134 = scmp.ne.s32.totalorder %s126, %s128
      %p135 = scmp.eq.s32.totalorder %s31, 3
      %p136 = por %p134, %p135
      %p137 = scmp.ne.s32.totalorder %s128, %s129
      %p138 = scmp.eq.s32.totalorder %s31, 0
      %p139 = por %p137, %p138
      %p140 = scmp.ne.s32.totalorder %s128, %s129
      %p141 = scmp.eq.s32.totalorder %s32, 3
      %p142 = por %p140, %p141
      %p144 = scmp.ne.s32.totalorder %s129, %s143
      %p145 = scmp.eq.s32.totalorder %s32, 0
      %p146 = por %p144, %p145
      %s148 = sadd.s32 %s147, 1
      %p151 = scmp.eq.s32.totalorder %s26, 3
      %p152 = scmp.ne.s32.totalorder %s147, %s149
      %p153 = scmp.eq.s32.totalorder %s26, 0
      %p154 = por %p152, %p153
      %p155 = scmp.ne.s32.totalorder %s147, %s149
      %p156 = scmp.eq.s32.totalorder %s31, 3
      %p157 = por %p155, %p156
      %p158 = scmp.ne.s32.totalorder %s149, %s150
      %p159 = scmp.eq.s32.totalorder %s31, 0
      %p160 = por %p158, %p159
      %p161 = scmp.ne.s32.totalorder %s149, %s150
      %p162 = scmp.eq.s32.totalorder %s32, 3
      %p163 = por %p161, %p162
      %p165 = scmp.ne.s32.totalorder %s150, %s164
      %p166 = scmp.eq.s32.totalorder %s32, 0
      %p167 = por %p165, %p166
      %s168 = ssub.s32 %s33, %s45
      %p169 = scmp.eq.s32.totalorder %s168, 0
      %s171 = sadd.s32 %s170, 1
      %s172 = scalar_select %p169, %s170, %s171
      %p175 = pneg %p169
      %p176 = scmp.eq.s32.totalorder %s26, 3
      %p177 = por %p175, %p176
      %p178 = scmp.ne.s32.totalorder %s170, %s173
      %p179 = scmp.eq.s32.totalorder %s26, 0
      %p180 = por %p178, %p179
      %p181 = scmp.ne.s32.totalorder %s170, %s173
      %p182 = scmp.eq.s32.totalorder %s31, 3
      %p183 = por %p181, %p182
      %p184 = scmp.ne.s32.totalorder %s173, %s174
      %p185 = scmp.eq.s32.totalorder %s31, 0
      %p186 = por %p184, %p185
      %p187 = scmp.ne.s32.totalorder %s173, %s174
      %p188 = scmp.eq.s32.totalorder %s32, 3
      %p189 = por %p187, %p188
      %p191 = scmp.ne.s32.totalorder %s174, %s190
      %p192 = scmp.eq.s32.totalorder %s32, 0
      %p193 = por %p191, %p192
      %s194 = ssub.s32 %s33, %s45
      %p195 = scmp.eq.s32.totalorder %s194, 0
      %s197 = sadd.s32 %s196, 1
      %s198 = scalar_select %p195, %s196, %s197
      %p201 = pneg %p195
      %p202 = scmp.eq.s32.totalorder %s26, 3
      %p203 = por %p201, %p202
      %p204 = scmp.ne.s32.totalorder %s196, %s199
      %p205 = scmp.eq.s32.totalorder %s26, 0
      %p206 = por %p204, %p205
      %p207 = scmp.ne.s32.totalorder %s196, %s199
      %p208 = scmp.eq.s32.totalorder %s31, 3
      %p209 = por %p207, %p208
      %p210 = scmp.ne.s32.totalorder %s199, %s200
      %p211 = scmp.eq.s32.totalorder %s31, 0
      %p212 = por %p210, %p211
      %p213 = scmp.ne.s32.totalorder %s199, %s200
      %p214 = scmp.eq.s32.totalorder %s32, 3
      %p215 = por %p213, %p214
      %p217 = scmp.ne.s32.totalorder %s200, %s216
      %p218 = scmp.eq.s32.totalorder %s32, 0
      %p219 = por %p217, %p218
      %p220 = scmp.le.s32.totalorder 1, %s26
      %p221 = scmp.lt.s32.totalorder %s26, 5
      %p222 = pnand %p220, %p221
      %p223 = pneg %p222
      // Predicated region
      $region9: #{tpu_custom_call.1} parent=5 // pred_check
        _
      $region10: #{tpu_custom_call.1} parent=5 // pred_check_branch
        %225 = sbr.rel (%p222) target = $region12
      $region11: #{tpu_custom_call.1} parent=5 // pred_region
        %s226 = ssub.s32 %s26, 1
        // Predicated region
        $region13: #{tpu_custom_call.1} parent=11 // pred_check
          %p227 = pneg %p139
        $region14: #{tpu_custom_call.1} parent=11 // pred_check_branch
          %229 = sbr.rel (%p227) target = $region16
        $region15: #{tpu_custom_call.1} parent=11 // pred_region
          %s231 = ssub.s32 4096, 4096
          %232 = vsyncadd [#allocation10], %s231
          %s233 = sshll.u32 [#allocation9], 4
          %s234 = int_to_ptr.vmem [resolvable:$true] %s233
          %239 = dma.hbm_to_vmem [thread:$0]  %s3, 4096, %s234, [#allocation10], 128, 128, 8
        $region16: #{tpu_custom_call.1} parent=11 // pred_fallthru
          _
        // Predicated region
        $region17: #{tpu_custom_call.1} parent=11 // pred_check
          %p240 = pneg %p160
        $region18: #{tpu_custom_call.1} parent=11 // pred_check_branch
          %242 = sbr.rel (%p240) target = $region20
        $region19: #{tpu_custom_call.1} parent=11 // pred_region
          _
        $region20: #{tpu_custom_call.1} parent=11 // pred_fallthru
          _
      $region12: #{tpu_custom_call.1} parent=5 // pred_fallthru
        _
      %p243 = scmp.lt.s32.totalorder %s26, 4
      // Predicated region
      $region21: #{tpu_custom_call.1} parent=5 // pred_check
        %p244 = pneg %p243
      $region22: #{tpu_custom_call.1} parent=5 // pred_check_branch
        %246 = sbr.rel (%p244) target = $region24
      $region23: #{tpu_custom_call.1} parent=5 // pred_region
        // Predicated region
        $region25: #{tpu_custom_call.1} parent=23 // pred_check
          %p247 = pneg %p60
        $region26: #{tpu_custom_call.1} parent=23 // pred_check_branch
          %249 = sbr.rel (%p247) target = $region28
        $region27: #{tpu_custom_call.1} parent=23 // pred_region
          %s250 = sand.u32 %s50, 1
          %s251 = scalar_lea.sflag [#allocation4], %s250
          %s252 = sand.u32 %s50, 1
          %s253 = smul.addr %s252, 64
          %s254 = scalar_lea.vmem [#allocation3], %s253
          %s255 = smul.u32 16, %s33
          %s257 = ssub.s32 1024, 1024
          %258 = vsyncadd %s251, %s257
          %s259 = smul.addr %s255, 2
          %s260 = sadd.s32 %s34, %s259
          %s261 = smul.addr %s260, 64
          %s262 = scalar_lea.hbm %s0, %s261
          %s263 = sshll.u32 %s254, 4
          %s264 = int_to_ptr.vmem [resolvable:$true] %s263
          %269 = dma.hbm_to_vmem [thread:$0]  %s262, 1024, %s264, %s251, 128, 64, 4
        $region28: #{tpu_custom_call.1} parent=23 // pred_fallthru
          _
        // Predicated region
        $region29: #{tpu_custom_call.1} parent=23 // pred_check
          %p270 = pneg %p86
        $region30: #{tpu_custom_call.1} parent=23 // pred_check_branch
          %272 = sbr.rel (%p270) target = $region32
        $region31: #{tpu_custom_call.1} parent=23 // pred_region
          %s273 = sand.u32 %s26, 1
          %s274 = scalar_lea.sflag [#allocation7], %s273
          %s275 = sand.u32 %s76, 1
          %s276 = smul.addr %s275, 64
          %s277 = scalar_lea.vmem [#allocation6], %s276
          %s278 = smul.u32 16, %s34
          %s280 = ssub.s32 1024, 1024
          %281 = vsyncadd %s274, %s280
          %s282 = smul.addr %s278, 64
          %s283 = scalar_lea.hbm %s1, %s282
          %s284 = sshll.u32 %s277, 4
          %s285 = int_to_ptr.vmem [resolvable:$true] %s284
          %290 = dma.hbm_to_vmem [thread:$0]  %s283, 1024, %s285, %s274, 64, 64, 4
        $region32: #{tpu_custom_call.1} parent=23 // pred_fallthru
          _
        // Predicated region
        $region33: #{tpu_custom_call.1} parent=23 // pred_check
          %p291 = pneg %p112
        $region34: #{tpu_custom_call.1} parent=23 // pred_check_branch
          %293 = sbr.rel (%p291) target = $region36
        $region35: #{tpu_custom_call.1} parent=23 // pred_region
          %s294 = sand.u32 %s26, 1
          %s295 = scalar_lea.sflag [#allocation7], %s294
          %s296 = sand.u32 %s102, 1
          %s297 = smul.addr %s296, 128
          %s298 = scalar_lea.vmem [#allocation8], %s297
          %s299 = smul.u32 16, %s33
          %s301 = ssub.s32 2048, 2048
          %302 = vsyncadd %s295, %s301
          %s303 = smul.addr %s299, 128
          %s304 = scalar_lea.hbm %s2, %s303
          %s305 = sshll.u32 %s298, 4
          %s306 = int_to_ptr.vmem [resolvable:$true] %s305
          %311 = dma.hbm_to_vmem [thread:$0]  %s304, 2048, %s306, %s295, 128, 128, 8
        $region36: #{tpu_custom_call.1} parent=23 // pred_fallthru
          _
      $region24: #{tpu_custom_call.1} parent=5 // pred_fallthru
        _
      %p312 = scmp.le.s32.totalorder 1, %s26
      %p313 = scmp.lt.s32.totalorder %s26, 5
      %p314 = pnand %p312, %p313
      %p315 = pneg %p314
      // Predicated region
      $region37: #{tpu_custom_call.1} parent=5 // pred_check
        _
      $region38: #{tpu_custom_call.1} parent=5 // pred_check_branch
        %317 = sbr.rel (%p314) target = $region40
      $region39: #{tpu_custom_call.1} parent=5 // pred_region
        %s318 = ssub.s32 %s26, 1
        %s319 = sand.u32 %s53, 1
        %s320 = scalar_lea.sflag [#allocation4], %s319
        %s321 = sand.u32 %s53, 1
        %s322 = smul.addr %s321, 64
        %s323 = scalar_lea.vmem [#allocation3], %s322
        // Predicated region
        $region41: #{tpu_custom_call.1} parent=39 // pred_check
          %p324 = pneg %p66
        $region42: #{tpu_custom_call.1} parent=39 // pred_check_branch
          %326 = sbr.rel (%p324) target = $region44
        $region43: #{tpu_custom_call.1} parent=39 // pred_region
          %327 = dma.done %s320, 1024
        $region44: #{tpu_custom_call.1} parent=39 // pred_fallthru
          _
        %s328 = sand.u32 %s31, 1
        %s329 = scalar_lea.sflag [#allocation7], %s328
        %s330 = sand.u32 %s79, 1
        %s331 = smul.addr %s330, 64
        %s332 = scalar_lea.vmem [#allocation6], %s331
        // Predicated region
        $region45: #{tpu_custom_call.1} parent=39 // pred_check
          %p333 = pneg %p92
        $region46: #{tpu_custom_call.1} parent=39 // pred_check_branch
          %335 = sbr.rel (%p333) target = $region48
        $region47: #{tpu_custom_call.1} parent=39 // pred_region
          %336 = dma.done %s329, 1024
        $region48: #{tpu_custom_call.1} parent=39 // pred_fallthru
          _
        %s337 = sand.u32 %s31, 1
        %s338 = scalar_lea.sflag [#allocation7], %s337
        %s339 = sand.u32 %s105, 1
        %s340 = smul.addr %s339, 128
        %s341 = scalar_lea.vmem [#allocation8], %s340
        // Predicated region
        $region49: #{tpu_custom_call.1} parent=39 // pred_check
          %p342 = pneg %p118
        $region50: #{tpu_custom_call.1} parent=39 // pred_check_branch
          %344 = sbr.rel (%p342) target = $region52
        $region51: #{tpu_custom_call.1} parent=39 // pred_region
          %345 = dma.done %s338, 2048
        $region52: #{tpu_custom_call.1} parent=39 // pred_fallthru
          _
        // Predicated region
        $region53: #{tpu_custom_call.1} parent=39 // pred_check
          %p346 = pneg %p139
        $region54: #{tpu_custom_call.1} parent=39 // pred_check_branch
          %348 = sbr.rel (%p346) target = $region56
        $region55: #{tpu_custom_call.1} parent=39 // pred_region
          %349 = dma.done [#allocation10], 4096
        $region56: #{tpu_custom_call.1} parent=39 // pred_fallthru
          _
        %s350 = sand.u32 %s53, 1
        %s351 = scalar_lea.sflag [#allocation4], %s350
        %s352 = sand.u32 %s53, 1
        %s353 = smul.addr %s352, 64
        %s354 = scalar_lea.vmem [#allocation3], %s353
        %p355 = pneg %p66
        %p356 = pneg %p63
        %s357 = sand.u32 %s31, 1
        %s358 = scalar_lea.sflag [#allocation7], %s357
        %s359 = sand.u32 %s79, 1
        %s360 = smul.addr %s359, 64
        %s361 = scalar_lea.vmem [#allocation6], %s360
        %p362 = pneg %p92
        %p363 = pneg %p89
        %s364 = sand.u32 %s31, 1
        %s365 = scalar_lea.sflag [#allocation7], %s364
        %s366 = sand.u32 %s105, 1
        %s367 = smul.addr %s366, 128
        %s368 = scalar_lea.vmem [#allocation8], %s367
        %p369 = pneg %p118
        %p370 = pneg %p115
        %p371 = pneg %p139
        %p372 = pneg %p136
        %p373 = pneg %p160
        %p374 = pneg %p157
        %p375 = pneg %p186
        %p376 = pneg %p183
        %s377 = sand.u32 %s173, 1
        %s378 = scalar_lea.sflag [#allocation5], %s377
        %s379 = sand.u32 %s173, 1
        %s380 = smul.addr %s379, 128
        %s381 = scalar_lea.vmem [#allocation11], %s380
        %p382 = pneg %p212
        %p383 = pneg %p209
        %s384 = sand.u32 %s199, 1
        %s385 = scalar_lea.sflag [#allocation13], %s384
        %s386 = sand.u32 %s199, 1
        %s387 = smul.addr %s386, 128
        %s388 = scalar_lea.vmem [#allocation12], %s387
        %s389 = smul.u32 16, %s35
        %s390 = smul.u32 16, %s36
        %s391 = smul.u32 16, %s35
        %s392 = smul.u32 16, %s35
        %s393 = smul.u32 16, %s35
        %p395 = scmp.eq.s32.totalorder %s36, 0
        // Predicated region
        $region57: #{tpu_custom_call.1} parent=39 // pred_check
          %p396 = pneg %p395
        $region58: #{tpu_custom_call.1} parent=39 // pred_check_branch
          %398 = sbr.rel (%p396) target = $region60
        $region59: #{tpu_custom_call.1} parent=39 // pred_region
          %399 = vst [vmem:[#allocation2] sm:$0xff] 0.0
          %400 = vst [vmem:[#allocation2 + $0x8] sm:$0xff] 0.0
          %401 = vst [vmem:[#allocation2 + $0x10] sm:$0xff] 0.0
          %402 = vst [vmem:[#allocation2 + $0x18] sm:$0xff] 0.0
          %403 = vst [vmem:[#allocation2 + $0x20] sm:$0xff] 0.0
          %404 = vst [vmem:[#allocation2 + $0x28] sm:$0xff] 0.0
          %405 = vst [vmem:[#allocation2 + $0x30] sm:$0xff] 0.0
          %406 = vst [vmem:[#allocation2 + $0x38] sm:$0xff] 0.0
          %407 = vst [vmem:[#allocation2 + $0x40] sm:$0xff] 0.0
          %408 = vst [vmem:[#allocation2 + $0x48] sm:$0xff] 0.0
          %409 = vst [vmem:[#allocation2 + $0x50] sm:$0xff] 0.0
          %410 = vst [vmem:[#allocation2 + $0x58] sm:$0xff] 0.0
          %411 = vst [vmem:[#allocation2 + $0x60] sm:$0xff] 0.0
          %412 = vst [vmem:[#allocation2 + $0x68] sm:$0xff] 0.0
          %413 = vst [vmem:[#allocation2 + $0x70] sm:$0xff] 0.0
          %414 = vst [vmem:[#allocation2 + $0x78] sm:$0xff] 0.0
        $region60: #{tpu_custom_call.1} parent=39 // pred_fallthru
          _
        %v415 = vld [vmem:[#allocation2] sm:$0xff]
        %v416 = vld [vmem:[#allocation2 + $0x8] sm:$0xff]
        %v417 = vld [vmem:[#allocation2 + $0x10] sm:$0xff]
        %v418 = vld [vmem:[#allocation2 + $0x18] sm:$0xff]
        %v419 = vld [vmem:[#allocation2 + $0x20] sm:$0xff]
        %v420 = vld [vmem:[#allocation2 + $0x28] sm:$0xff]
        %v421 = vld [vmem:[#allocation2 + $0x30] sm:$0xff]
        %v422 = vld [vmem:[#allocation2 + $0x38] sm:$0xff]
        %v423 = vld [vmem:[#allocation2 + $0x40] sm:$0xff]
        %v424 = vld [vmem:[#allocation2 + $0x48] sm:$0xff]
        %v425 = vld [vmem:[#allocation2 + $0x50] sm:$0xff]
        %v426 = vld [vmem:[#allocation2 + $0x58] sm:$0xff]
        %v427 = vld [vmem:[#allocation2 + $0x60] sm:$0xff]
        %v428 = vld [vmem:[#allocation2 + $0x68] sm:$0xff]
        %v429 = vld [vmem:[#allocation2 + $0x70] sm:$0xff]
        %v430 = vld [vmem:[#allocation2 + $0x78] sm:$0xff]
        %v431 = vld [vmem:[%s323] sm:$0xf]
        %v432 = vld [vmem:[%s323 + $0x4] sm:$0xf]
        %v433 = vld [vmem:[%s323 + $0x8] sm:$0xf]
        %v434 = vld [vmem:[%s323 + $0xc] sm:$0xf]
        %v435 = vld [vmem:[%s323 + $0x10] sm:$0xf]
        %v436 = vld [vmem:[%s323 + $0x14] sm:$0xf]
        %v437 = vld [vmem:[%s323 + $0x18] sm:$0xf]
        %v438 = vld [vmem:[%s323 + $0x1c] sm:$0xf]
        %v439 = vld [vmem:[%s323 + $0x20] sm:$0xf]
        %v440 = vld [vmem:[%s323 + $0x24] sm:$0xf]
        %v441 = vld [vmem:[%s323 + $0x28] sm:$0xf]
        %v442 = vld [vmem:[%s323 + $0x2c] sm:$0xf]
        %v443 = vld [vmem:[%s323 + $0x30] sm:$0xf]
        %v444 = vld [vmem:[%s323 + $0x34] sm:$0xf]
        %v445 = vld [vmem:[%s323 + $0x38] sm:$0xf]
        %v446 = vld [vmem:[%s323 + $0x3c] sm:$0xf]
        %v447 = vld [vmem:[%s332] sm:$0xf]
        %v448 = vld [vmem:[%s332 + $0x4] sm:$0xf]
        %v449 = vld [vmem:[%s332 + $0x8] sm:$0xf]
        %v450 = vld [vmem:[%s332 + $0xc] sm:$0xf]
        %v451 = vld [vmem:[%s332 + $0x10] sm:$0xf]
        %v452 = vld [vmem:[%s332 + $0x14] sm:$0xf]
        %v453 = vld [vmem:[%s332 + $0x18] sm:$0xf]
        %v454 = vld [vmem:[%s332 + $0x1c] sm:$0xf]
        %v455 = vld [vmem:[%s332 + $0x20] sm:$0xf]
        %v456 = vld [vmem:[%s332 + $0x24] sm:$0xf]
        %v457 = vld [vmem:[%s332 + $0x28] sm:$0xf]
        %v458 = vld [vmem:[%s332 + $0x2c] sm:$0xf]
        %v459 = vld [vmem:[%s332 + $0x30] sm:$0xf]
        %v460 = vld [vmem:[%s332 + $0x34] sm:$0xf]
        %v461 = vld [vmem:[%s332 + $0x38] sm:$0xf]
        %v462 = vld [vmem:[%s332 + $0x3c] sm:$0xf]
        %v479 = vunpack.c.l.b16 %v431
        %v480 = vunpack.c.l.b16 %v432
        %v481 = vunpack.c.l.b16 %v433
        %v482 = vunpack.c.l.b16 %v434
        %v483 = vunpack.c.l.b16 %v435
        %v484 = vunpack.c.l.b16 %v436
        %v485 = vunpack.c.l.b16 %v437
        %v486 = vunpack.c.l.b16 %v438
        %v487 = vunpack.c.l.b16 %v439
        %v488 = vunpack.c.l.b16 %v440
        %v489 = vunpack.c.l.b16 %v441
        %v490 = vunpack.c.l.b16 %v442
        %v491 = vunpack.c.l.b16 %v443
        %v492 = vunpack.c.l.b16 %v444
        %v493 = vunpack.c.l.b16 %v445
        %v494 = vunpack.c.l.b16 %v446
        %v495 = vpack.c.b16 %v480, %v479
        %v496 = vpack.c.b16 %v482, %v481
        %v497 = vpack.c.b16 %v484, %v483
        %v498 = vpack.c.b16 %v486, %v485
        %v499 = vpack.c.b16 %v488, %v487
        %v500 = vpack.c.b16 %v490, %v489
        %v501 = vpack.c.b16 %v492, %v491
        %v502 = vpack.c.b16 %v494, %v493
        %v527 = vunpack.c.l.b16 %v447
        %v528 = vunpack.c.l.b16 %v448
        %v529 = vunpack.c.l.b16 %v449
        %v530 = vunpack.c.l.b16 %v450
        %v531 = vunpack.c.l.b16 %v451
        %v532 = vunpack.c.l.b16 %v452
        %v533 = vunpack.c.l.b16 %v453
        %v534 = vunpack.c.l.b16 %v454
        %v535 = vunpack.c.l.b16 %v455
        %v536 = vunpack.c.l.b16 %v456
        %v537 = vunpack.c.l.b16 %v457
        %v538 = vunpack.c.l.b16 %v458
        %v539 = vunpack.c.l.b16 %v459
        %v540 = vunpack.c.l.b16 %v460
        %v541 = vunpack.c.l.b16 %v461
        %v542 = vunpack.c.l.b16 %v462
        %v543 = vpack.c.b16 %v528, %v527
        %v544 = vpack.c.b16 %v530, %v529
        %v545 = vpack.c.b16 %v532, %v531
        %v546 = vpack.c.b16 %v534, %v533
        %v547 = vpack.c.b16 %v536, %v535
        %v548 = vpack.c.b16 %v538, %v537
        %v549 = vpack.c.b16 %v540, %v539
        %v550 = vpack.c.b16 %v542, %v541
        %559 = vmatprep.subr.bf16.mxu0 0
        %560 = vmatpush1.bf16.msra.mxu0 %v543
        %561 = vmatprep.subr.bf16.mxu0 0
        %562 = vmatpush1.bf16.msra.mxu0 %v544
        %563 = vmatprep.subr.bf16.mxu0 0
        %564 = vmatpush1.bf16.msra.mxu0 %v545
        %565 = vmatprep.subr.bf16.mxu0 0
        %566 = vmatpush1.bf16.msra.mxu0 %v546
        %567 = vmatprep.subr.bf16.mxu0 0
        %568 = vmatpush1.bf16.msra.mxu0 %v547
        %569 = vmatprep.subr.bf16.mxu0 0
        %570 = vmatpush1.bf16.msra.mxu0 %v548
        %571 = vmatprep.subr.bf16.mxu0 0
        %572 = vmatpush1.bf16.msra.mxu0 %v549
        %573 = vmatprep.subr.bf16.mxu0 0
        %574 = vmatpush1.bf16.msra.mxu0 %v550
        %575 = vmatprep.subr.bf16.mxu0 0
        %576 = vmatpush1.bf16.msra.mxu0 0
        %577 = vmatprep.subr.bf16.mxu0 0
        %578 = vmatpush1.bf16.msra.mxu0 0
        %579 = vmatprep.subr.bf16.mxu0 0
        %580 = vmatpush1.bf16.msra.mxu0 0
        %581 = vmatprep.subr.bf16.mxu0 0
        %582 = vmatpush1.bf16.msra.mxu0 0
        %583 = vmatprep.subr.bf16.mxu0 0
        %584 = vmatpush1.bf16.msra.mxu0 0
        %585 = vmatprep.subr.bf16.mxu0 0
        %586 = vmatpush1.bf16.msra.mxu0 0
        %587 = vmatprep.subr.bf16.mxu0 0
        %588 = vmatpush1.bf16.msra.mxu0 0
        %589 = vmatprep.subr.bf16.mxu0 0
        %590 = vmatpush1.bf16.msra.mxu0 0
        %591 = vmatprep.mubr.bf16.mxu0 0
        %592 = vmatmul.mubr.bf16.gmra.mrb[0].mxu0 %v495
        %v593 = vpop.f32.mrb[0].mxu0
        %v594 = vadd.f32 0.0, %v593
        %v595 = vpop.f32.mrb[0].mxu0
        %v596 = vpop.f32.mrb[0].mxu0
        %v597 = vadd.f32 0.0, %v596
        %v598 = vpop.f32.mrb[0].mxu0
        %599 = vmatprep.mubr.bf16.mxu0 0
        %600 = vmatmul.mubr.bf16.gmra.mrb[0].mxu0 %v496
        %v601 = vpop.f32.mrb[0].mxu0
        %v602 = vadd.f32 0.0, %v601
        %v603 = vpop.f32.mrb[0].mxu0
        %v604 = vpop.f32.mrb[0].mxu0
        %v605 = vadd.f32 0.0, %v604
        %v606 = vpop.f32.mrb[0].mxu0
        %607 = vmatprep.mubr.bf16.mxu0 0
        %608 = vmatmul.mubr.bf16.gmra.mrb[0].mxu0 %v497
        %v609 = vpop.f32.mrb[0].mxu0
        %v610 = vadd.f32 0.0, %v609
        %v611 = vpop.f32.mrb[0].mxu0
        %v612 = vpop.f32.mrb[0].mxu0
        %v613 = vadd.f32 0.0, %v612
        %v614 = vpop.f32.mrb[0].mxu0
        %615 = vmatprep.mubr.bf16.mxu0 0
        %616 = vmatmul.mubr.bf16.gmra.mrb[0].mxu0 %v498
        %v617 = vpop.f32.mrb[0].mxu0
        %v618 = vadd.f32 0.0, %v617
        %v619 = vpop.f32.mrb[0].mxu0
        %v620 = vpop.f32.mrb[0].mxu0
        %v621 = vadd.f32 0.0, %v620
        %v622 = vpop.f32.mrb[0].mxu0
        %623 = vmatprep.mubr.bf16.mxu0 0
        %624 = vmatmul.mubr.bf16.gmra.mrb[0].mxu0 %v499
        %v625 = vpop.f32.mrb[0].mxu0
        %v626 = vadd.f32 0.0, %v625
        %v627 = vpop.f32.mrb[0].mxu0
        %v628 = vpop.f32.mrb[0].mxu0
        %v629 = vadd.f32 0.0, %v628
        %v630 = vpop.f32.mrb[0].mxu0
        %631 = vmatprep.mubr.bf16.mxu0 0
        %632 = vmatmul.mubr.bf16.gmra.mrb[0].mxu0 %v500
        %v633 = vpop.f32.mrb[0].mxu0
        %v634 = vadd.f32 0.0, %v633
        %v635 = vpop.f32.mrb[0].mxu0
        %v636 = vpop.f32.mrb[0].mxu0
        %v637 = vadd.f32 0.0, %v636
        %v638 = vpop.f32.mrb[0].mxu0
        %639 = vmatprep.mubr.bf16.mxu0 0
        %640 = vmatmul.mubr.bf16.gmra.mrb[0].mxu0 %v501
        %v641 = vpop.f32.mrb[0].mxu0
        %v642 = vadd.f32 0.0, %v641
        %v643 = vpop.f32.mrb[0].mxu0
        %v644 = vpop.f32.mrb[0].mxu0
        %v645 = vadd.f32 0.0, %v644
        %v646 = vpop.f32.mrb[0].mxu0
        %647 = vmatprep.mubr.bf16.mxu0 0
        %648 = vmatmul.mubr.bf16.gmra.mrb[0].mxu0 %v502
        %v649 = vpop.f32.mrb[0].mxu0
        %v650 = vadd.f32 0.0, %v649
        %v651 = vpop.f32.mrb[0].mxu0
        %v652 = vpop.f32.mrb[0].mxu0
        %v653 = vadd.f32 0.0, %v652
        %v654 = vpop.f32.mrb[0].mxu0
        %655 = vdwg.mxu0
        %v656 = vadd.f32 %v415, %v594
        %v657 = vadd.f32 %v416, %v597
        %v658 = vadd.f32 %v417, %v602
        %v659 = vadd.f32 %v418, %v605
        %v660 = vadd.f32 %v419, %v610
        %v661 = vadd.f32 %v420, %v613
        %v662 = vadd.f32 %v421, %v618
        %v663 = vadd.f32 %v422, %v621
        %v664 = vadd.f32 %v423, %v626
        %v665 = vadd.f32 %v424, %v629
        %v666 = vadd.f32 %v425, %v634
        %v667 = vadd.f32 %v426, %v637
        %v668 = vadd.f32 %v427, %v642
        %v669 = vadd.f32 %v428, %v645
        %v670 = vadd.f32 %v429, %v650
        %v671 = vadd.f32 %v430, %v653
        %672 = vst [vmem:[#allocation2] sm:$0xff] %v656
        %673 = vst [vmem:[#allocation2 + $0x8] sm:$0xff] %v657
        %674 = vst [vmem:[#allocation2 + $0x10] sm:$0xff] %v658
        %675 = vst [vmem:[#allocation2 + $0x18] sm:$0xff] %v659
        %676 = vst [vmem:[#allocation2 + $0x20] sm:$0xff] %v660
        %677 = vst [vmem:[#allocation2 + $0x28] sm:$0xff] %v661
        %678 = vst [vmem:[#allocation2 + $0x30] sm:$0xff] %v662
        %679 = vst [vmem:[#allocation2 + $0x38] sm:$0xff] %v663
        %680 = vst [vmem:[#allocation2 + $0x40] sm:$0xff] %v664
        %681 = vst [vmem:[#allocation2 + $0x48] sm:$0xff] %v665
        %682 = vst [vmem:[#allocation2 + $0x50] sm:$0xff] %v666
        %683 = vst [vmem:[#allocation2 + $0x58] sm:$0xff] %v667
        %684 = vst [vmem:[#allocation2 + $0x60] sm:$0xff] %v668
        %685 = vst [vmem:[#allocation2 + $0x68] sm:$0xff] %v669
        %686 = vst [vmem:[#allocation2 + $0x70] sm:$0xff] %v670
        %687 = vst [vmem:[#allocation2 + $0x78] sm:$0xff] %v671
        %p688 = scmp.eq.s32.totalorder %s36, 1
        // Predicated region
        $region61: #{tpu_custom_call.1} parent=39 // pred_check
          %p689 = pneg %p688
        $region62: #{tpu_custom_call.1} parent=39 // pred_check_branch
          %691 = sbr.rel (%p689) target = $region64
        $region63: #{tpu_custom_call.1} parent=39 // pred_region
          %v692 = vld [vmem:[#allocation2] sm:$0xff]
          %v693 = vld [vmem:[#allocation2 + $0x8] sm:$0xff]
          %v694 = vld [vmem:[#allocation2 + $0x10] sm:$0xff]
          %v695 = vld [vmem:[#allocation2 + $0x18] sm:$0xff]
          %v696 = vld [vmem:[#allocation2 + $0x20] sm:$0xff]
          %v697 = vld [vmem:[#allocation2 + $0x28] sm:$0xff]
          %v698 = vld [vmem:[#allocation2 + $0x30] sm:$0xff]
          %v699 = vld [vmem:[#allocation2 + $0x38] sm:$0xff]
          %v700 = vld [vmem:[#allocation2 + $0x40] sm:$0xff]
          %v701 = vld [vmem:[#allocation2 + $0x48] sm:$0xff]
          %v702 = vld [vmem:[#allocation2 + $0x50] sm:$0xff]
          %v703 = vld [vmem:[#allocation2 + $0x58] sm:$0xff]
          %v704 = vld [vmem:[#allocation2 + $0x60] sm:$0xff]
          %v705 = vld [vmem:[#allocation2 + $0x68] sm:$0xff]
          %v706 = vld [vmem:[#allocation2 + $0x70] sm:$0xff]
          %v707 = vld [vmem:[#allocation2 + $0x78] sm:$0xff]
          %v708 = vld [vmem:[%s341] sm:$0xff]
          %v709 = vld [vmem:[%s341 + $0x8] sm:$0xff]
          %v710 = vld [vmem:[%s341 + $0x10] sm:$0xff]
          %v711 = vld [vmem:[%s341 + $0x18] sm:$0xff]
          %v712 = vld [vmem:[%s341 + $0x20] sm:$0xff]
          %v713 = vld [vmem:[%s341 + $0x28] sm:$0xff]
          %v714 = vld [vmem:[%s341 + $0x30] sm:$0xff]
          %v715 = vld [vmem:[%s341 + $0x38] sm:$0xff]
          %v716 = vld [vmem:[%s341 + $0x40] sm:$0xff]
          %v717 = vld [vmem:[%s341 + $0x48] sm:$0xff]
          %v718 = vld [vmem:[%s341 + $0x50] sm:$0xff]
          %v719 = vld [vmem:[%s341 + $0x58] sm:$0xff]
          %v720 = vld [vmem:[%s341 + $0x60] sm:$0xff]
          %v721 = vld [vmem:[%s341 + $0x68] sm:$0xff]
          %v722 = vld [vmem:[%s341 + $0x70] sm:$0xff]
          %v723 = vld [vmem:[%s341 + $0x78] sm:$0xff]
          %v724 = vmul.f32 %v708, %v692
          %v725 = vmul.f32 %v709, %v693
          %v726 = vmul.f32 %v710, %v694
          %v727 = vmul.f32 %v711, %v695
          %v728 = vmul.f32 %v712, %v696
          %v729 = vmul.f32 %v713, %v697
          %v730 = vmul.f32 %v714, %v698
          %v731 = vmul.f32 %v715, %v699
          %v732 = vmul.f32 %v716, %v700
          %v733 = vmul.f32 %v717, %v701
          %v734 = vmul.f32 %v718, %v702
          %v735 = vmul.f32 %v719, %v703
          %v736 = vmul.f32 %v720, %v704
          %v737 = vmul.f32 %v721, %v705
          %v738 = vmul.f32 %v722, %v706
          %v739 = vmul.f32 %v723, %v707
          %v740 = vld [vmem:[#allocation9] sm:$0xff]
          %v741 = vld [vmem:[#allocation9 + $0x8] sm:$0xff]
          %v742 = vld [vmem:[#allocation9 + $0x10] sm:$0xff]
          %v743 = vld [vmem:[#allocation9 + $0x18] sm:$0xff]
          %v744 = vld [vmem:[#allocation9 + $0x20] sm:$0xff]
          %v745 = vld [vmem:[#allocation9 + $0x28] sm:$0xff]
          %v746 = vld [vmem:[#allocation9 + $0x30] sm:$0xff]
          %v747 = vld [vmem:[#allocation9 + $0x38] sm:$0xff]
          %v748 = vld [vmem:[#allocation9 + $0x40] sm:$0xff]
          %v749 = vld [vmem:[#allocation9 + $0x48] sm:$0xff]
          %v750 = vld [vmem:[#allocation9 + $0x50] sm:$0xff]
          %v751 = vld [vmem:[#allocation9 + $0x58] sm:$0xff]
          %v752 = vld [vmem:[#allocation9 + $0x60] sm:$0xff]
          %v753 = vld [vmem:[#allocation9 + $0x68] sm:$0xff]
          %v754 = vld [vmem:[#allocation9 + $0x70] sm:$0xff]
          %v755 = vld [vmem:[#allocation9 + $0x78] sm:$0xff]
          %v756 = vld [vmem:[#allocation9 + $0x80] sm:$0xff]
          %v757 = vld [vmem:[#allocation9 + $0x88] sm:$0xff]
          %v758 = vld [vmem:[#allocation9 + $0x90] sm:$0xff]
          %v759 = vld [vmem:[#allocation9 + $0x98] sm:$0xff]
          %v760 = vld [vmem:[#allocation9 + $0xa0] sm:$0xff]
          %v761 = vld [vmem:[#allocation9 + $0xa8] sm:$0xff]
          %v762 = vld [vmem:[#allocation9 + $0xb0] sm:$0xff]
          %v763 = vld [vmem:[#allocation9 + $0xb8] sm:$0xff]
          %v764 = vld [vmem:[#allocation9 + $0xc0] sm:$0xff]
          %v765 = vld [vmem:[#allocation9 + $0xc8] sm:$0xff]
          %v766 = vld [vmem:[#allocation9 + $0xd0] sm:$0xff]
          %v767 = vld [vmem:[#allocation9 + $0xd8] sm:$0xff]
          %v768 = vld [vmem:[#allocation9 + $0xe0] sm:$0xff]
          %v769 = vld [vmem:[#allocation9 + $0xe8] sm:$0xff]
          %v770 = vld [vmem:[#allocation9 + $0xf0] sm:$0xff]
          %v771 = vld [vmem:[#allocation9 + $0xf8] sm:$0xff]
          %v772 = vld [vmem:[%s4] sm:$0x1]
          %v774 = vlaneseq
          %v775 = vshrl.u32 %v774, 7
          %v776 = vsub.s32 0, %v775
          %v777 = vrot.slane %v772, %v776
          %779 = vmatprep.subr.mxu0 0.0
          %780 = vmatpush1.msra.mxu0 %v740
          %781 = vmatprep.subr.mxu0 0.0
          %782 = vmatpush1.msra.mxu0 %v741
          %783 = vmatprep.subr.mxu0 0.0
          %784 = vmatpush1.msra.mxu0 %v742
          %785 = vmatprep.subr.mxu0 0.0
          %786 = vmatpush1.msra.mxu0 %v743
          %787 = vmatprep.subr.mxu0 0.0
          %788 = vmatpush1.msra.mxu0 %v744
          %789 = vmatprep.subr.mxu0 0.0
          %790 = vmatpush1.msra.mxu0 %v745
          %791 = vmatprep.subr.mxu0 0.0
          %792 = vmatpush1.msra.mxu0 %v746
          %793 = vmatprep.subr.mxu0 0.0
          %794 = vmatpush1.msra.mxu0 %v747
          %795 = vmatprep.subr.mxu0 0.0
          %796 = vmatpush1.msra.mxu0 %v748
          %797 = vmatprep.subr.mxu0 0.0
          %798 = vmatpush1.msra.mxu0 %v749
          %799 = vmatprep.subr.mxu0 0.0
          %800 = vmatpush1.msra.mxu0 %v750
          %801 = vmatprep.subr.mxu0 0.0
          %802 = vmatpush1.msra.mxu0 %v751
          %803 = vmatprep.subr.mxu0 0.0
          %804 = vmatpush1.msra.mxu0 %v752
          %805 = vmatprep.subr.mxu0 0.0
          %806 = vmatpush1.msra.mxu0 %v753
          %807 = vmatprep.subr.mxu0 0.0
          %808 = vmatpush1.msra.mxu0 %v754
          %809 = vmatprep.subr.mxu0 0.0
          %810 = vmatpush1.msra.mxu0 %v755
          %811 = vmatprep.subr.mxu0 0.0
          %812 = vmatpush1.msra.mxu0 %v756
          %813 = vmatprep.subr.mxu0 0.0
          %814 = vmatpush1.msra.mxu0 %v757
          %815 = vmatprep.subr.mxu0 0.0
          %816 = vmatpush1.msra.mxu0 %v758
          %817 = vmatprep.subr.mxu0 0.0
          %818 = vmatpush1.msra.mxu0 %v759
          %819 = vmatprep.subr.mxu0 0.0
          %820 = vmatpush1.msra.mxu0 %v760
          %821 = vmatprep.subr.mxu0 0.0
          %822 = vmatpush1.msra.mxu0 %v761
          %823 = vmatprep.subr.mxu0 0.0
          %824 = vmatpush1.msra.mxu0 %v762
          %825 = vmatprep.subr.mxu0 0.0
          %826 = vmatpush1.msra.mxu0 %v763
          %827 = vmatprep.subr.mxu0 0.0
          %828 = vmatpush1.msra.mxu0 %v764
          %829 = vmatprep.subr.mxu0 0.0
          %830 = vmatpush1.msra.mxu0 %v765
          %831 = vmatprep.subr.mxu0 0.0
          %832 = vmatpush1.msra.mxu0 %v766
          %833 = vmatprep.subr.mxu0 0.0
          %834 = vmatpush1.msra.mxu0 %v767
          %835 = vmatprep.subr.mxu0 0.0
          %836 = vmatpush1.msra.mxu0 %v768
          %837 = vmatprep.subr.mxu0 0.0
          %838 = vmatpush1.msra.mxu0 %v769
          %839 = vmatprep.subr.mxu0 0.0
          %840 = vmatpush1.msra.mxu0 %v770
          %841 = vmatprep.subr.mxu0 0.0
          %842 = vmatpush1.msra.mxu0 %v771
          %843 = vmatprep.mubr.f32.mxu0 %v724
          %844 = vmatmul.mubr.f32.gmra.mrb[0].mxu0 %v692
          %v845 = vpop.f32.mrb[0].mxu0
          %v846 = vadd.f32 %v777, %v845
          %v847 = vpop.f32.mrb[0].mxu0
          %848 = vmatprep.mubr.f32.mxu0 %v725
          %849 = vmatmul.mubr.f32.gmra.mrb[0].mxu0 %v693
          %v850 = vpop.f32.mrb[0].mxu0
          %v851 = vadd.f32 %v777, %v850
          %v852 = vpop.f32.mrb[0].mxu0
          %853 = vmatprep.mubr.f32.mxu0 %v726
          %854 = vmatmul.mubr.f32.gmra.mrb[0].mxu0 %v694
          %v855 = vpop.f32.mrb[0].mxu0
          %v856 = vadd.f32 %v777, %v855
          %v857 = vpop.f32.mrb[0].mxu0
          %858 = vmatprep.mubr.f32.mxu0 %v727
          %859 = vmatmul.mubr.f32.gmra.mrb[0].mxu0 %v695
          %v860 = vpop.f32.mrb[0].mxu0
          %v861 = vadd.f32 %v777, %v860
          %v862 = vpop.f32.mrb[0].mxu0
          %863 = vmatprep.mubr.f32.mxu0 %v728
          %864 = vmatmul.mubr.f32.gmra.mrb[0].mxu0 %v696
          %v865 = vpop.f32.mrb[0].mxu0
          %v866 = vadd.f32 %v777, %v865
          %v867 = vpop.f32.mrb[0].mxu0
          %868 = vmatprep.mubr.f32.mxu0 %v729
          %869 = vmatmul.mubr.f32.gmra.mrb[0].mxu0 %v697
          %v870 = vpop.f32.mrb[0].mxu0
          %v871 = vadd.f32 %v777, %v870
          %v872 = vpop.f32.mrb[0].mxu0
          %873 = vmatprep.mubr.f32.mxu0 %v730
          %874 = vmatmul.mubr.f32.gmra.mrb[0].mxu0 %v698
          %v875 = vpop.f32.mrb[0].mxu0
          %v876 = vadd.f32 %v777, %v875
          %v877 = vpop.f32.mrb[0].mxu0
          %878 = vmatprep.mubr.f32.mxu0 %v731
          %879 = vmatmul.mubr.f32.gmra.mrb[0].mxu0 %v699
          %v880 = vpop.f32.mrb[0].mxu0
          %v881 = vadd.f32 %v777, %v880
          %v882 = vpop.f32.mrb[0].mxu0
          %883 = vmatprep.mubr.f32.mxu0 %v732
          %884 = vmatmul.mubr.f32.gmra.mrb[0].mxu0 %v700
          %v885 = vpop.f32.mrb[0].mxu0
          %v886 = vadd.f32 %v777, %v885
          %v887 = vpop.f32.mrb[0].mxu0
          %888 = vmatprep.mubr.f32.mxu0 %v733
          %889 = vmatmul.mubr.f32.gmra.mrb[0].mxu0 %v701
          %v890 = vpop.f32.mrb[0].mxu0
          %v891 = vadd.f32 %v777, %v890
          %v892 = vpop.f32.mrb[0].mxu0
          %893 = vmatprep.mubr.f32.mxu0 %v734
          %894 = vmatmul.mubr.f32.gmra.mrb[0].mxu0 %v702
          %v895 = vpop.f32.mrb[0].mxu0
          %v896 = vadd.f32 %v777, %v895
          %v897 = vpop.f32.mrb[0].mxu0
          %898 = vmatprep.mubr.f32.mxu0 %v735
          %899 = vmatmul.mubr.f32.gmra.mrb[0].mxu0 %v703
          %v900 = vpop.f32.mrb[0].mxu0
          %v901 = vadd.f32 %v777, %v900
          %v902 = vpop.f32.mrb[0].mxu0
          %903 = vmatprep.mubr.f32.mxu0 %v736
          %904 = vmatmul.mubr.f32.gmra.mrb[0].mxu0 %v704
          %v905 = vpop.f32.mrb[0].mxu0
          %v906 = vadd.f32 %v777, %v905
          %v907 = vpop.f32.mrb[0].mxu0
          %908 = vmatprep.mubr.f32.mxu0 %v737
          %909 = vmatmul.mubr.f32.gmra.mrb[0].mxu0 %v705
          %v910 = vpop.f32.mrb[0].mxu0
          %v911 = vadd.f32 %v777, %v910
          %v912 = vpop.f32.mrb[0].mxu0
          %913 = vmatprep.mubr.f32.mxu0 %v738
          %914 = vmatmul.mubr.f32.gmra.mrb[0].mxu0 %v706
          %v915 = vpop.f32.mrb[0].mxu0
          %v916 = vadd.f32 %v777, %v915
          %v917 = vpop.f32.mrb[0].mxu0
          %918 = vmatprep.mubr.f32.mxu0 %v739
          %919 = vmatmul.mubr.f32.gmra.mrb[0].mxu0 %v707
          %v920 = vpop.f32.mrb[0].mxu0
          %v921 = vadd.f32 %v777, %v920
          %v922 = vpop.f32.mrb[0].mxu0
          %923 = vdwg.mxu0
          %vm924 = vcmp.ge.f32.partialorder %v846, 0.0
          %vm925 = vcmp.ge.f32.partialorder %v851, 0.0
          %vm926 = vcmp.ge.f32.partialorder %v856, 0.0
          %vm927 = vcmp.ge.f32.partialorder %v861, 0.0
          %vm928 = vcmp.ge.f32.partialorder %v866, 0.0
          %vm929 = vcmp.ge.f32.partialorder %v871, 0.0
          %vm930 = vcmp.ge.f32.partialorder %v876, 0.0
          %vm931 = vcmp.ge.f32.partialorder %v881, 0.0
          %vm932 = vcmp.ge.f32.partialorder %v886, 0.0
          %vm933 = vcmp.ge.f32.partialorder %v891, 0.0
          %vm934 = vcmp.ge.f32.partialorder %v896, 0.0
          %vm935 = vcmp.ge.f32.partialorder %v901, 0.0
          %vm936 = vcmp.ge.f32.partialorder %v906, 0.0
          %vm937 = vcmp.ge.f32.partialorder %v911, 0.0
          %vm938 = vcmp.ge.f32.partialorder %v916, 0.0
          %vm939 = vcmp.ge.f32.partialorder %v921, 0.0
          %v940 = vmul.f32 %v846, 0.2
          %v941 = vmul.f32 %v851, 0.2
          %v942 = vmul.f32 %v856, 0.2
          %v943 = vmul.f32 %v861, 0.2
          %v944 = vmul.f32 %v866, 0.2
          %v945 = vmul.f32 %v871, 0.2
          %v946 = vmul.f32 %v876, 0.2
          %v947 = vmul.f32 %v881, 0.2
          %v948 = vmul.f32 %v886, 0.2
          %v949 = vmul.f32 %v891, 0.2
          %v950 = vmul.f32 %v896, 0.2
          %v951 = vmul.f32 %v901, 0.2
          %v952 = vmul.f32 %v906, 0.2
          %v953 = vmul.f32 %v911, 0.2
          %v954 = vmul.f32 %v916, 0.2
          %v955 = vmul.f32 %v921, 0.2
          %v956 = vsel %vm924, %v846, %v940
          %v957 = vsel %vm925, %v851, %v941
          %v958 = vsel %vm926, %v856, %v942
          %v959 = vsel %vm927, %v861, %v943
          %v960 = vsel %vm928, %v866, %v944
          %v961 = vsel %vm929, %v871, %v945
          %v962 = vsel %vm930, %v876, %v946
          %v963 = vsel %vm931, %v881, %v947
          %v964 = vsel %vm932, %v886, %v948
          %v965 = vsel %vm933, %v891, %v949
          %v966 = vsel %vm934, %v896, %v950
          %v967 = vsel %vm935, %v901, %v951
          %v968 = vsel %vm936, %v906, %v952
          %v969 = vsel %vm937, %v911, %v953
          %v970 = vsel %vm938, %v916, %v954
          %v971 = vsel %vm939, %v921, %v955
          %v972 = vmul.f32 %v956, %v956
          %v973 = vmul.f32 %v957, %v957
          %v974 = vmul.f32 %v958, %v958
          %v975 = vmul.f32 %v959, %v959
          %v976 = vmul.f32 %v960, %v960
          %v977 = vmul.f32 %v961, %v961
          %v978 = vmul.f32 %v962, %v962
          %v979 = vmul.f32 %v963, %v963
          %v980 = vmul.f32 %v964, %v964
          %v981 = vmul.f32 %v965, %v965
          %v982 = vmul.f32 %v966, %v966
          %v983 = vmul.f32 %v967, %v967
          %v984 = vmul.f32 %v968, %v968
          %v985 = vmul.f32 %v969, %v969
          %v986 = vmul.f32 %v970, %v970
          %v987 = vmul.f32 %v971, %v971
          %988 = vadd.xlane.f32.xlu0 %v972
          %v989 = vpop.xlane.xlu0 %988
          %990 = vadd.xlane.f32.xlu0 %v973
          %v991 = vpop.xlane.xlu0 %990
          %992 = vadd.xlane.f32.xlu0 %v974
          %v993 = vpop.xlane.xlu0 %992
          %994 = vadd.xlane.f32.xlu0 %v975
          %v995 = vpop.xlane.xlu0 %994
          %996 = vadd.xlane.f32.xlu0 %v976
          %v997 = vpop.xlane.xlu0 %996
          %998 = vadd.xlane.f32.xlu0 %v977
          %v999 = vpop.xlane.xlu0 %998
          %1000 = vadd.xlane.f32.xlu0 %v978
          %v1001 = vpop.xlane.xlu0 %1000
          %1002 = vadd.xlane.f32.xlu0 %v979
          %v1003 = vpop.xlane.xlu0 %1002
          %1004 = vadd.xlane.f32.xlu0 %v980
          %v1005 = vpop.xlane.xlu0 %1004
          %1006 = vadd.xlane.f32.xlu0 %v981
          %v1007 = vpop.xlane.xlu0 %1006
          %1008 = vadd.xlane.f32.xlu0 %v982
          %v1009 = vpop.xlane.xlu0 %1008
          %1010 = vadd.xlane.f32.xlu0 %v983
          %v1011 = vpop.xlane.xlu0 %1010
          %1012 = vadd.xlane.f32.xlu0 %v984
          %v1013 = vpop.xlane.xlu0 %1012
          %1014 = vadd.xlane.f32.xlu0 %v985
          %v1015 = vpop.xlane.xlu0 %1014
          %1016 = vadd.xlane.f32.xlu0 %v986
          %v1017 = vpop.xlane.xlu0 %1016
          %1018 = vadd.xlane.f32.xlu0 %v987
          %v1019 = vpop.xlane.xlu0 %1018
          %v1020 = vmax.f32 %v989, 1e-24
          %v1021 = vmax.f32 %v991, 1e-24
          %v1022 = vmax.f32 %v993, 1e-24
          %v1023 = vmax.f32 %v995, 1e-24
          %v1024 = vmax.f32 %v997, 1e-24
          %v1025 = vmax.f32 %v999, 1e-24
          %v1026 = vmax.f32 %v1001, 1e-24
          %v1027 = vmax.f32 %v1003, 1e-24
          %v1028 = vmax.f32 %v1005, 1e-24
          %v1029 = vmax.f32 %v1007, 1e-24
          %v1030 = vmax.f32 %v1009, 1e-24
          %v1031 = vmax.f32 %v1011, 1e-24
          %v1032 = vmax.f32 %v1013, 1e-24
          %v1033 = vmax.f32 %v1015, 1e-24
          %v1034 = vmax.f32 %v1017, 1e-24
          %v1035 = vmax.f32 %v1019, 1e-24
          %v1036 = vrsqrt.pop %v1020
          %v1037 = vrsqrt.pop %v1021
          %v1038 = vrsqrt.pop %v1022
          %v1039 = vrsqrt.pop %v1023
          %v1040 = vrsqrt.pop %v1024
          %v1041 = vrsqrt.pop %v1025
          %v1042 = vrsqrt.pop %v1026
          %v1043 = vrsqrt.pop %v1027
          %v1044 = vrsqrt.pop %v1028
          %v1045 = vrsqrt.pop %v1029
          %v1046 = vrsqrt.pop %v1030
          %v1047 = vrsqrt.pop %v1031
          %v1048 = vrsqrt.pop %v1032
          %v1049 = vrsqrt.pop %v1033
          %v1050 = vrsqrt.pop %v1034
          %v1051 = vrsqrt.pop %v1035
          %1052 = vst [vmem:[%s381] sm:$0xff] %v956
          %1053 = vst [vmem:[%s381 + $0x8] sm:$0xff] %v957
          %1054 = vst [vmem:[%s381 + $0x10] sm:$0xff] %v958
          %1055 = vst [vmem:[%s381 + $0x18] sm:$0xff] %v959
          %1056 = vst [vmem:[%s381 + $0x20] sm:$0xff] %v960
          %1057 = vst [vmem:[%s381 + $0x28] sm:$0xff] %v961
          %1058 = vst [vmem:[%s381 + $0x30] sm:$0xff] %v962
          %1059 = vst [vmem:[%s381 + $0x38] sm:$0xff] %v963
          %1060 = vst [vmem:[%s381 + $0x40] sm:$0xff] %v964
          %1061 = vst [vmem:[%s381 + $0x48] sm:$0xff] %v965
          %1062 = vst [vmem:[%s381 + $0x50] sm:$0xff] %v966
          %1063 = vst [vmem:[%s381 + $0x58] sm:$0xff] %v967
          %1064 = vst [vmem:[%s381 + $0x60] sm:$0xff] %v968
          %1065 = vst [vmem:[%s381 + $0x68] sm:$0xff] %v969
          %1066 = vst [vmem:[%s381 + $0x70] sm:$0xff] %v970
          %1067 = vst [vmem:[%s381 + $0x78] sm:$0xff] %v971
          %v1068 = vmul.f32 %v956, %v1036
          %v1069 = vmul.f32 %v957, %v1037
          %v1070 = vmul.f32 %v958, %v1038
          %v1071 = vmul.f32 %v959, %v1039
          %v1072 = vmul.f32 %v960, %v1040
          %v1073 = vmul.f32 %v961, %v1041
          %v1074 = vmul.f32 %v962, %v1042
          %v1075 = vmul.f32 %v963, %v1043
          %v1076 = vmul.f32 %v964, %v1044
          %v1077 = vmul.f32 %v965, %v1045
          %v1078 = vmul.f32 %v966, %v1046
          %v1079 = vmul.f32 %v967, %v1047
          %v1080 = vmul.f32 %v968, %v1048
          %v1081 = vmul.f32 %v969, %v1049
          %v1082 = vmul.f32 %v970, %v1050
          %v1083 = vmul.f32 %v971, %v1051
          %1084 = vst [vmem:[%s388] sm:$0xff] %v1068
          %1085 = vst [vmem:[%s388 + $0x8] sm:$0xff] %v1069
          %1086 = vst [vmem:[%s388 + $0x10] sm:$0xff] %v1070
          %1087 = vst [vmem:[%s388 + $0x18] sm:$0xff] %v1071
          %1088 = vst [vmem:[%s388 + $0x20] sm:$0xff] %v1072
          %1089 = vst [vmem:[%s388 + $0x28] sm:$0xff] %v1073
          %1090 = vst [vmem:[%s388 + $0x30] sm:$0xff] %v1074
          %1091 = vst [vmem:[%s388 + $0x38] sm:$0xff] %v1075
          %1092 = vst [vmem:[%s388 + $0x40] sm:$0xff] %v1076
          %1093 = vst [vmem:[%s388 + $0x48] sm:$0xff] %v1077
          %1094 = vst [vmem:[%s388 + $0x50] sm:$0xff] %v1078
          %1095 = vst [vmem:[%s388 + $0x58] sm:$0xff] %v1079
          %1096 = vst [vmem:[%s388 + $0x60] sm:$0xff] %v1080
          %1097 = vst [vmem:[%s388 + $0x68] sm:$0xff] %v1081
          %1098 = vst [vmem:[%s388 + $0x70] sm:$0xff] %v1082
          %1099 = vst [vmem:[%s388 + $0x78] sm:$0xff] %v1083
        $region64: #{tpu_custom_call.1} parent=39 // pred_fallthru
          _
        %s1100 = sand.u32 %s173, 1
        %s1101 = scalar_lea.sflag [#allocation5], %s1100
        %s1102 = sand.u32 %s173, 1
        %s1103 = smul.addr %s1102, 128
        %s1104 = scalar_lea.vmem [#allocation11], %s1103
        %s1105 = sand.u32 %s199, 1
        %s1106 = scalar_lea.sflag [#allocation13], %s1105
        %s1107 = sand.u32 %s199, 1
        %s1108 = smul.addr %s1107, 128
        %s1109 = scalar_lea.vmem [#allocation12], %s1108
        // Predicated region
        $region65: #{tpu_custom_call.1} parent=39 // pred_check
          %p1110 = pneg %p183
        $region66: #{tpu_custom_call.1} parent=39 // pred_check_branch
          %1112 = sbr.rel (%p1110) target = $region68
        $region67: #{tpu_custom_call.1} parent=39 // pred_region
          %s1113 = smul.u32 16, %s35
          %s1115 = ssub.s32 2048, 2048
          %1116 = vsyncadd %s1101, %s1115
          %s1117 = smul.addr %s1113, 128
          %s1118 = scalar_lea.hbm %s5, %s1117
          %s1119 = sshll.u32 %s1104, 4
          %s1120 = int_to_ptr.vmem [resolvable:$true] %s1119
          %1125 = dma.vmem_to_hbm [thread:$0]  %s1120, 2048, %s1118, %s1101, 128, 128, 8
        $region68: #{tpu_custom_call.1} parent=39 // pred_fallthru
          _
        // Predicated region
        $region69: #{tpu_custom_call.1} parent=39 // pred_check
          %p1126 = pneg %p209
        $region70: #{tpu_custom_call.1} parent=39 // pred_check_branch
          %1128 = sbr.rel (%p1126) target = $region72
        $region71: #{tpu_custom_call.1} parent=39 // pred_region
          %s1129 = smul.u32 16, %s35
          %s1131 = ssub.s32 2048, 2048
          %1132 = vsyncadd %s1106, %s1131
          %s1133 = smul.addr %s1129, 128
          %s1134 = scalar_lea.hbm %s6, %s1133
          %s1135 = sshll.u32 %s1109, 4
          %s1136 = int_to_ptr.vmem [resolvable:$true] %s1135
          %1141 = dma.vmem_to_hbm [thread:$0]  %s1136, 2048, %s1134, %s1106, 128, 128, 8
        $region72: #{tpu_custom_call.1} parent=39 // pred_fallthru
          _
      $region40: #{tpu_custom_call.1} parent=5 // pred_fallthru
        _
      %p1142 = scmp.le.s32.totalorder 2, %s26
      // Predicated region
      $region73: #{tpu_custom_call.1} parent=5 // pred_check
        %p1143 = pneg %p1142
      $region74: #{tpu_custom_call.1} parent=5 // pred_check_branch
        %1145 = sbr.rel (%p1143) target = $region76
      $region75: #{tpu_custom_call.1} parent=5 // pred_region
        %s1146 = ssub.s32 %s26, 2
        // Predicated region
        $region77: #{tpu_custom_call.1} parent=75 // pred_check
          %p1147 = pneg %p189
        $region78: #{tpu_custom_call.1} parent=75 // pred_check_branch
          %1149 = sbr.rel (%p1147) target = $region80
        $region79: #{tpu_custom_call.1} parent=75 // pred_region
          %s1150 = sand.u32 %s174, 1
          %s1151 = scalar_lea.sflag [#allocation5], %s1150
          %s1152 = sand.u32 %s174, 1
          %s1153 = smul.addr %s1152, 128
          %s1154 = scalar_lea.vmem [#allocation11], %s1153
          %1155 = dma.done %s1151, 2048
        $region80: #{tpu_custom_call.1} parent=75 // pred_fallthru
          _
        // Predicated region
        $region81: #{tpu_custom_call.1} parent=75 // pred_check
          %p1156 = pneg %p215
        $region82: #{tpu_custom_call.1} parent=75 // pred_check_branch
          %1158 = sbr.rel (%p1156) target = $region84
        $region83: #{tpu_custom_call.1} parent=75 // pred_region
          %s1159 = sand.u32 %s200, 1
          %s1160 = scalar_lea.sflag [#allocation13], %s1159
          %s1161 = sand.u32 %s200, 1
          %s1162 = smul.addr %s1161, 128
          %s1163 = scalar_lea.vmem [#allocation12], %s1162
          %1164 = dma.done %s1160, 2048
        $region84: #{tpu_custom_call.1} parent=75 // pred_fallthru
          _
      $region76: #{tpu_custom_call.1} parent=5 // pred_fallthru
        _
    $region6: #{tpu_custom_call.1} parent=1 // loop_footer
      %s30 = sadd.s32 1, %s26
    $region7: #{tpu_custom_call.1} parent=1 // loop_footer_branch
      %25 = sbr.rel target = $region3
    $region8: #{tpu_custom_call.1} parent=1 // loop_exit
      _
    %1165 = vsyncpa [#allocation4], 1
    %s1166 = scalar_lea.sflag [#allocation4], 1
    %1167 = vsyncpa %s1166, 1
    %1168 = vsyncpa [#allocation7], 1
    %s1169 = scalar_lea.sflag [#allocation7], 1
    %1170 = vsyncpa %s1169, 1
    %1171 = vsyncpa [#allocation10], 1
    %1172 = vsyncpa [#allocation5], 1
    %s1173 = scalar_lea.sflag [#allocation5], 1
    %1174 = vsyncpa %s1173, 1
    %1175 = vsyncpa [#allocation13], 1
    %s1176 = scalar_lea.sflag [#allocation13], 1
    %1177 = vsyncpa %s1176, 1

</llo_original>
